<compile_context>
chip_gen: v7x
topology: tpu7x:2x2x1
jax: 0.10.0
libtpu: 0.0.40
codegen_flags: <defaults>
</compile_context>

<pallas_src>
import functools

import jax
import jax.numpy as jnp
from jax.experimental import pallas as pl
from jax.experimental.pallas import tpu as pltpu


def _layernorm_kernel(x_ref, scale_ref, shift_ref, o_ref, *, eps):
    # x_ref: (tile_rows, emb_dim) in the input dtype.
    x = x_ref[...].astype(jnp.float32)
    inv_n = 1.0 / x.shape[-1]

    # Two-pass variance: mean first, then sum of centered squares.  Avoids the
    # E[x^2] - mean^2 cancellation, and `centered` is reused in the epilogue.
    mean = jnp.sum(x, axis=-1, keepdims=True) * inv_n          # (tile_rows, 1)
    centered = x - mean
    var = jnp.sum(centered * centered, axis=-1, keepdims=True) * inv_n
    inv_std = jax.lax.rsqrt(var + eps)                          # EUP slot

    scale = scale_ref[...]                                      # (1, emb_dim) fp32
    shift = shift_ref[...]                                      # (1, emb_dim) fp32
    o_ref[...] = (centered * inv_std * scale + shift).astype(o_ref.dtype)


def _tpu_hw_params():
    """Best-effort (VMEM capacity in bytes, TensorCores per chip)."""
    vmem_cap = 64 * 1024 * 1024          # conservative default (v7x-sized)
    num_cores = 1
    try:
        info = pltpu.get_tpu_info()
        vmem_cap = int(getattr(info, "vmem_capacity_bytes", vmem_cap))
        for name in ("num_cores", "core_count", "num_tensorcores"):
            v = getattr(info, name, None)
            if v:
                num_cores = int(v)
                break
    except Exception:
        pass
    return vmem_cap, num_cores


def _choose_row_tile(rows, emb_dim, dtype_bytes, vmem_cap, num_cores):
    """Sublane-aligned row tile sized by a per-tile byte budget."""
    # Sublane alignment: 8 for 32-bit, 16 for bf16/fp16, 32 for 8-bit dtypes.
    align = max(8, 32 // max(dtype_bytes, 1))

    # Per input-tile byte target.  LayerNorm is HBM-bound; big tiles amortize
    # the ~600-cycle grid-step overhead.  ~5 MiB on 64 MiB-VMEM chips (v7x),
    # ~7 MiB on 128 MiB-VMEM chips (v5e/v6e).
    target = 5 * 1024 * 1024 if vmem_cap <= 64 * 1024 * 1024 else 7 * 1024 * 1024
    row_bytes = max(emb_dim * dtype_bytes, 1)
    tile = max(align, (target // row_bytes) // align * align)

    rows_aligned = -(-rows // align) * align
    tile = min(tile, rows_aligned)
    tile = max(tile, align)

    # Only on multi-TensorCore chips: make sure there are >= num_cores grid
    # steps so the row axis can be sharded across cores.  On single-core
    # v5e/v6e an extra grid step is pure overhead, so skip it.
    if num_cores > 1:
        while -(-rows // tile) < num_cores and tile > align:
            tile = max(align, (tile // 2) // align * align)
    return tile


def layernorm_pallas(x, scale, shift, eps=1e-5):
    orig_shape = x.shape
    emb_dim = orig_shape[-1]
    rows = 1
    for d in orig_shape[:-1]:
        rows *= d

    x2d = x.reshape(rows, emb_dim)
    # Parameters stay fp32 (tiny, VMEM-resident); no lossy downcast.
    scale2d = scale.reshape(1, emb_dim).astype(jnp.float32)
    shift2d = shift.reshape(1, emb_dim).astype(jnp.float32)

    dtype_bytes = jnp.dtype(x.dtype).itemsize
    vmem_cap, num_cores = _tpu_hw_params()
    tile = _choose_row_tile(rows, emb_dim, dtype_bytes, vmem_cap, num_cores)

    # No row padding / output slice: Pallas handles the ragged last block
    # (per-row op, garbage OOB rows are never written back).
    num_blocks = pl.cdiv(rows, tile)

    # VMEM accounting: double-buffered in + out tiles, fp32 upcast/centered
    # temporaries of the tile, and sublane/lane-padded scale/shift blocks.
    tile_io_bytes = 2 * 2 * tile * emb_dim * dtype_bytes
    tile_f32_tmp = 2 * tile * emb_dim * 4
    emb_pad = -(-emb_dim // 128) * 128
    params_bytes = 2 * 2 * 8 * emb_pad * 4
    vmem_limit = tile_io_bytes + tile_f32_tmp + params_bytes + (4 << 20)
    vmem_limit = int(min(max(vmem_limit, 16 * 1024 * 1024), vmem_cap))

    # Shard the row axis across TensorCores when the chip actually has >1
    # (v7x / megacore); otherwise plain "parallel".
    dim_sem = ("parallel",)
    if num_cores > 1 and num_blocks >= num_cores and hasattr(pltpu, "CORE_PARALLEL"):
        dim_sem = (pltpu.CORE_PARALLEL,)

    cost = pl.CostEstimate(
        flops=8 * rows * emb_dim,
        transcendentals=rows,
        bytes_accessed=2 * rows * emb_dim * dtype_bytes + 2 * emb_dim * 4,
    )

    kernel = functools.partial(_layernorm_kernel, eps=eps)

    # TODO(synk): emb_dim not a multiple of 128 produces masked vst.msk partial
    # stores; lane-padding would need in-kernel masking and extra HBM traffic,
    # so it is left as-is for these shapes.
    out2d = pl.pallas_call(
        kernel,
        out_shape=jax.ShapeDtypeStruct((rows, emb_dim), x.dtype),
        grid_spec=pl.GridSpec(
            grid=(num_blocks,),
            in_specs=[
                pl.BlockSpec((tile, emb_dim), lambda i: (i, 0)),
                pl.BlockSpec((1, emb_dim), lambda i: (0, 0)),
                pl.BlockSpec((1, emb_dim), lambda i: (0, 0)),
            ],
            out_specs=pl.BlockSpec((tile, emb_dim), lambda i: (i, 0)),
        ),
        compiler_params=pltpu.CompilerParams(
            dimension_semantics=dim_sem,
            vmem_limit_bytes=vmem_limit,
        ),
        cost_estimate=cost,
    )(x2d, scale2d, shift2d)

    return out2d.reshape(orig_shape)


if __name__ == "__main__":
    key = jax.random.PRNGKey(0)
    batch, seq, emb_dim = 2, 8, 32

    # Matches nn.Parameter(torch.ones(emb_dim)) / torch.zeros(emb_dim).
    scale = jnp.ones((emb_dim,), dtype=jnp.float32)
    shift = jnp.zeros((emb_dim,), dtype=jnp.float32)

    x = jax.random.normal(key, (batch, seq, emb_dim), dtype=jnp.float32)

    out = layernorm_pallas(x, scale, shift)
    out = jax.block_until_ready(out)

    # Reference check in plain JAX (same math as the PyTorch module,
    # torch.var(..., unbiased=False)).
    mean = jnp.mean(x, axis=-1, keepdims=True)
    var = jnp.mean((x - mean) ** 2, axis=-1, keepdims=True)
    ref = scale * ((x - mean) / jnp.sqrt(var + 1e-5)) + shift
    assert jnp.allclose(out, ref, atol=1e-5, rtol=1e-5), "mismatch vs reference"

    print("KERNEL_OK")
</pallas_src>

<mosaic_0001>
module attributes {stable_mosaic.version = 11 : i64} {
  func.func @_layernorm_kernel(%arg0: i32, %arg1: memref<16x32xf32, #tpu.memory_space<vmem>>, %arg2: memref<1x32xf32, #tpu.memory_space<vmem>>, %arg3: memref<1x32xf32, #tpu.memory_space<vmem>>, %arg4: memref<16x32xf32, #tpu.memory_space<vmem>>) attributes {dimension_semantics = [#tpu.dimension_semantics<parallel>], iteration_bounds = array<i64: 1>, scalar_prefetch = 0 : i64, scratch_operands = 0 : i64, tpu.core_type = #tpu.core_type<tc>, window_params = [{transform_indices = @transform_0, window_bounds = array<i64: 16, 32>}, {pipeline_mode = #tpu.pipeline_mode<synchronous>, transform_indices = @transform_1, window_bounds = array<i64: 1, 32>}, {pipeline_mode = #tpu.pipeline_mode<synchronous>, transform_indices = @transform_2, window_bounds = array<i64: 1, 32>}, {transform_indices = @transform_3, window_bounds = array<i64: 16, 32>}]} {
    %c0 = arith.constant 0 : index
    %c0_0 = arith.constant 0 : index
    %0 = vector.load %arg1[%c0, %c0_0] : memref<16x32xf32, #tpu.memory_space<vmem>>, vector<16x32xf32>
    %cst = arith.constant dense<0.000000e+00> : vector<16xf32>
    %1 = vector.multi_reduction <add>, %0, %cst [1] : vector<16x32xf32> to vector<16xf32>
    %2 = vector.shape_cast %1 : vector<16xf32> to vector<16x1xf32>
    %cst_1 = arith.constant 3.125000e-02 : f32
    %3 = vector.broadcast %cst_1 : f32 to vector<16x1xf32>
    %4 = arith.mulf %2, %3 : vector<16x1xf32>
    %5 = vector.broadcast %4 : vector<16x1xf32> to vector<16x32xf32>
    %6 = arith.subf %0, %5 : vector<16x32xf32>
    %7 = arith.mulf %6, %6 : vector<16x32xf32>
    %cst_2 = arith.constant dense<0.000000e+00> : vector<16xf32>
    %8 = vector.multi_reduction <add>, %7, %cst_2 [1] : vector<16x32xf32> to vector<16xf32>
    %9 = vector.shape_cast %8 : vector<16xf32> to vector<16x1xf32>
    %cst_3 = arith.constant 3.125000e-02 : f32
    %10 = vector.broadcast %cst_3 : f32 to vector<16x1xf32>
    %11 = arith.mulf %9, %10 : vector<16x1xf32>
    %cst_4 = arith.constant 9.99999974E-6 : f32
    %12 = vector.broadcast %cst_4 : f32 to vector<16x1xf32>
    %13 = arith.addf %11, %12 : vector<16x1xf32>
    %14 = math.rsqrt %13 : vector<16x1xf32>
    %c0_5 = arith.constant 0 : index
    %c0_6 = arith.constant 0 : index
    %15 = vector.load %arg2[%c0_5, %c0_6] : memref<1x32xf32, #tpu.memory_space<vmem>>, vector<1x32xf32>
    %c0_7 = arith.constant 0 : index
    %c0_8 = arith.constant 0 : index
    %16 = vector.load %arg3[%c0_7, %c0_8] : memref<1x32xf32, #tpu.memory_space<vmem>>, vector<1x32xf32>
    %17 = vector.broadcast %14 : vector<16x1xf32> to vector<16x32xf32>
    %18 = arith.mulf %6, %17 : vector<16x32xf32>
    %19 = vector.broadcast %15 : vector<1x32xf32> to vector<16x32xf32>
    %20 = arith.mulf %18, %19 : vector<16x32xf32>
    %21 = vector.broadcast %16 : vector<1x32xf32> to vector<16x32xf32>
    %22 = arith.addf %20, %21 : vector<16x32xf32>
    %c0_9 = arith.constant 0 : index
    %c0_10 = arith.constant 0 : index
    %23 = vector.load %arg4[%c0_9, %c0_10] : memref<16x32xf32, #tpu.memory_space<vmem>>, vector<16x32xf32>
    tpu.vector_store %arg4[%c0_9, %c0_10], %22 {strides = array<i32>} : memref<16x32xf32, #tpu.memory_space<vmem>>, vector<16x32xf32>,
    return
  }
  func.func @transform_0(%arg0: i32) -> (i32, i32) {
    %c0_i32 = arith.constant 0 : i32
    %c0_i32_0 = arith.constant 0 : i32
    return %arg0, %c0_i32 : i32, i32
  }
  func.func @transform_1(%arg0: i32) -> (i32, i32) {
    %c0_i32 = arith.constant 0 : i32
    %c0_i32_0 = arith.constant 0 : i32
    %c0_i32_1 = arith.constant 0 : i32
    return %c0_i32, %c0_i32_0 : i32, i32
  }
  func.func @transform_2(%arg0: i32) -> (i32, i32) {
    %c0_i32 = arith.constant 0 : i32
    %c0_i32_0 = arith.constant 0 : i32
    %c0_i32_1 = arith.constant 0 : i32
    return %c0_i32, %c0_i32_0 : i32, i32
  }
  func.func @transform_3(%arg0: i32) -> (i32, i32) {
    %c0_i32 = arith.constant 0 : i32
    %c0_i32_0 = arith.constant 0 : i32
    return %arg0, %c0_i32 : i32, i32
  }
}

</mosaic_0001>

<llo_original>
// kernel: tpu_custom_call.1
$region0: #{tpu_custom_call.1}
  #allocation0 [shape = 'u32[]', space=smem, size = 0x4, offset = 0x4, fixed_abs, tag = 'smem constant byte address 0x4 - core index']
  #allocation1 [shape = 'u32[144,128]{1,0:T(1,128)}', space=vmem, size = 0x12000, scoped, tag = 'internal scratch']
  %s0 = inlined_call_operand.hbm [shape: f32[16,32], index: 0, kind: input, shape index: {}]
  %s1 = inlined_call_operand.vmem [shape: f32[1,32], index: 1, kind: input, shape index: {}]
  %s2 = inlined_call_operand.vmem [shape: f32[1,32], index: 2, kind: input, shape index: {}]
  %s3 = inlined_call_operand.hbm [shape: f32[16,32], index: 3, kind: output, shape index: {}]
  %s4 = sld [smem:[#allocation0]]
  $region26: #{tpu_custom_call.1} parent=0
    _
  %s6 = ssub.s32 1, %s4
  %s7 = scalar_select 0, %s6, %s4
  $region1: #{tpu_custom_call.1} parent=0
    #allocation2 [shape = 'u8[8192]{0}', space=vmem, size = 0x2000, scoped, tag = 'input window, operand 0, single buffered']
    #allocation3 [shape = 's32[1]{0}', space=sflag, size = 0x4, scoped, tag = 'scoped memory for tpu_custom_call.1']
    #allocation4 [shape = 's32[1]{0}', space=sflag, size = 0x4, scoped, tag = 'scoped memory for tpu_custom_call.1']
    #allocation5 [shape = 'u8[8192]{0}', space=vmem, size = 0x2000, scoped, tag = 'output window, operand 0, single buffered']
    %8 = vsyncpa [#allocation3], 0
    %9 = vsyncpa [#allocation4], 0
    // Predicated region
    $region2: #{tpu_custom_call.1} parent=1 // pred_check
      _
    $region3: #{tpu_custom_call.1} parent=1 // pred_check_branch
      %11 = sbr.rel (0) target = $region5
    $region4: #{tpu_custom_call.1} parent=1 // pred_region
      %s13 = ssub.s32 256, 256
      %14 = vsyncadd [#allocation3], %s13
      %s15 = sshll.u32 [#allocation2], 4
      %s16 = int_to_ptr.vmem [resolvable:$true] %s15
      %21 = dma.hbm_to_vmem [thread:$0]  %s0, 256, %s16, [#allocation3], 128, 128, 8
    $region5: #{tpu_custom_call.1} parent=1 // pred_fallthru
      _
    // Predicated region
    $region6: #{tpu_custom_call.1} parent=1 // pred_check
      _
    $region7: #{tpu_custom_call.1} parent=1 // pred_check_branch
      %23 = sbr.rel (0) target = $region9
    $region8: #{tpu_custom_call.1} parent=1 // pred_region
      _
    $region9: #{tpu_custom_call.1} parent=1 // pred_fallthru
      _
    // Predicated region
    $region10: #{tpu_custom_call.1} parent=1 // pred_check
      _
    $region11: #{tpu_custom_call.1} parent=1 // pred_check_branch
      %25 = sbr.rel (0) target = $region13
    $region12: #{tpu_custom_call.1} parent=1 // pred_region
      _
    $region13: #{tpu_custom_call.1} parent=1 // pred_fallthru
      _
    // Predicated region
    $region14: #{tpu_custom_call.1} parent=1 // pred_check
      _
    $region15: #{tpu_custom_call.1} parent=1 // pred_check_branch
      %27 = sbr.rel (0) target = $region17
    $region16: #{tpu_custom_call.1} parent=1 // pred_region
      %28 = dma.done [#allocation3], 256
    $region17: #{tpu_custom_call.1} parent=1 // pred_fallthru
      _
    %v29 = vld [vmem:[#allocation2] sm:$0xff]
    %v30 = vld [vmem:[#allocation2 + $0x8] sm:$0xff]
    %vm31 = vcmask 261120
    %v32 = vsel %vm31, %v29, 0.0
    %33 = vadd.xlane.f32.xlu0 %v32
    %v34 = vpop.xlane.xlu0 %33
    %v35 = vsel %vm31, %v30, 0.0
    %36 = vadd.xlane.f32.xlu0 %v35
    %v37 = vpop.xlane.xlu0 %36
    %v38 = vmul.f32 %v34, 0.03125
    %v39 = vmul.f32 %v37, 0.03125
    %v40 = vsub.f32 %v29, %v38
    %v41 = vsub.f32 %v30, %v39
    %v42 = vmul.f32 %v40, %v40
    %v43 = vmul.f32 %v41, %v41
    %v44 = vsel %vm31, %v42, 0.0
    %45 = vadd.xlane.f32.xlu0 %v44
    %v46 = vpop.xlane.xlu0 %45
    %v47 = vsel %vm31, %v43, 0.0
    %48 = vadd.xlane.f32.xlu0 %v47
    %v49 = vpop.xlane.xlu0 %48
    %v50 = vmul.f32 %v46, 0.03125
    %v51 = vmul.f32 %v49, 0.03125
    %v52 = vadd.f32 %v50, 1e-05
    %v53 = vadd.f32 %v51, 1e-05
    %v54 = vrsqrt.pop %v52
    %v55 = vrsqrt.pop %v53
    %v56 = vld [vmem:[%s1] sm:$0x1]
    %v57 = vld [vmem:[%s2] sm:$0x1]
    %v58 = vmul.f32 %v40, %v54
    %v59 = vmul.f32 %v41, %v55
    %v61 = vlaneseq
    %v62 = vshrl.u32 %v61, 7
    %v63 = vsub.s32 0, %v62
    %v64 = vrot.slane %v56, %v63
    %v66 = vmul.f32 %v58, %v64
    %v67 = vmul.f32 %v59, %v64
    %v69 = vlaneseq
    %v70 = vshrl.u32 %v69, 7
    %v71 = vsub.s32 0, %v70
    %v72 = vrot.slane %v57, %v71
    %v74 = vadd.f32 %v66, %v72
    %v75 = vadd.f32 %v67, %v72
    %76 = vst.msk [vmem:[#allocation5] sm:$0xff] %vm31, %v74
    %77 = vst.msk [vmem:[#allocation5 + $0x8] sm:$0xff] %vm31, %v75
    // Predicated region
    $region18: #{tpu_custom_call.1} parent=1 // pred_check
      _
    $region19: #{tpu_custom_call.1} parent=1 // pred_check_branch
      %79 = sbr.rel (0) target = $region21
    $region20: #{tpu_custom_call.1} parent=1 // pred_region
      %s81 = ssub.s32 256, 256
      %82 = vsyncadd [#allocation4], %s81
      %s83 = sshll.u32 [#allocation5], 4
      %s84 = int_to_ptr.vmem [resolvable:$true] %s83
      %89 = dma.vmem_to_hbm [thread:$0]  %s84, 256, %s3, [#allocation4], 128, 128, 8
    $region21: #{tpu_custom_call.1} parent=1 // pred_fallthru
      _
    // Predicated region
    $region22: #{tpu_custom_call.1} parent=1 // pred_check
      _
    $region23: #{tpu_custom_call.1} parent=1 // pred_check_branch
      %91 = sbr.rel (0) target = $region25
    $region24: #{tpu_custom_call.1} parent=1 // pred_region
      %92 = dma.done [#allocation4], 256
    $region25: #{tpu_custom_call.1} parent=1 // pred_fallthru
      _
    %93 = vsyncpa [#allocation3], 1
    %94 = vsyncpa [#allocation4], 1

</llo_original>
